<compile_context>
chip_gen: v7x
topology: tpu7x:2x2x1
jax: 0.10.0
libtpu: 0.0.40
codegen_flags: <defaults>
</compile_context>

<pallas_src>
import jax
import jax.numpy as jnp
from jax.experimental import pallas as pl
from jax.experimental.pallas import tpu as pltpu


_SAMPLES_PER_ROW = 128                 # output lanes per slab row
_ROW_LANES = 2 * _SAMPLES_PER_ROW      # 256 interleaved (x0, x1) lanes per row
_PAD_SAMPLES = 1024                    # pad N to this -> rows is a multiple of 8
_MAX_BLOCK_ROWS = 4096                 # 512K samples/step (~12 MiB dbl-buffered)
_MIN_PALLAS_BATCH = 1024               # below this plain XLA wins


def _round_up(x, m):
    return ((x + m - 1) // m) * m


def _choose_block_rows(rows):
    """rows is a multiple of 8.  Pick big blocks to amortize per-step overhead,
    capped so (a) the double-buffered footprint stays ~12 MiB (v7x-safe) and
    (b) large inputs get >= 4 grid steps (v7x megacore sharding)."""
    return max(8, min(_MAX_BLOCK_ROWS, _round_up(pl.cdiv(rows, 4), 8)))


def _logreg_kernel(b_ref, x_ref, g_ref, o_ref):
    # b_ref: SMEM (1,)  f32                      -- bias scalar
    # x_ref: VMEM (BR, 256) in-dtype             -- 128 samples/row, features
    #                                               interleaved along lanes
    # g_ref: VMEM (256, 128) in-dtype, resident  -- G[2j, j]=w0, G[2j+1, j]=w1
    # o_ref: VMEM (BR, 128) f32                  -- dense sample-major output
    #
    # One MXU contraction performs both the lane deinterleave and the
    # 2-feature weighted sum; the kernel is HBM-bound so MXU time is hidden.
    z = jnp.dot(x_ref[...], g_ref[...], preferred_element_type=jnp.float32)
    z = z + b_ref[0]
    # sigmoid(z) = 0.5*tanh(0.5*z) + 0.5 : a single EUP push per vreg
    # (exp + reciprocal would be two) and exact (no approx reciprocal).
    o_ref[...] = 0.5 * jnp.tanh(0.5 * z) + 0.5


def _logreg_pallas(x, weight, bias):
    n = x.shape[0]
    # Stream bf16 inputs natively (halves input HBM bytes); anything else is
    # consumed as f32.  We never force a downcast pass for f32 inputs.
    in_dtype = jnp.bfloat16 if x.dtype == jnp.bfloat16 else jnp.float32
    x = x.astype(in_dtype)

    n_pad = _round_up(n, _PAD_SAMPLES)
    if n_pad != n:
        # Only copy when N is not already 1024-aligned.
        # TODO(synk): for huge unaligned N, run the aligned prefix through the
        # kernel and only pad the <1024-sample tail to avoid this full copy.
        x = jnp.zeros((n_pad, 2), in_dtype).at[:n, :].set(x)
    rows = n_pad // _SAMPLES_PER_ROW                 # multiple of 8
    x2d = x.reshape(rows, _ROW_LANES)                # free: contiguous reshape

    # G folds the per-feature weights into a lane-deinterleaving contraction:
    # (x2d @ G)[r, j] = w0 * x[128*r + j, 0] + w1 * x[128*r + j, 1].
    w = weight.reshape(-1).astype(jnp.float32)       # (2,) = [w0, w1]
    eye = jnp.eye(_SAMPLES_PER_ROW, dtype=jnp.float32)
    g = jnp.stack([w[0] * eye, w[1] * eye], axis=1)
    g = g.reshape(_ROW_LANES, _SAMPLES_PER_ROW).astype(in_dtype)
    b = bias.reshape(-1).astype(jnp.float32)         # (1,) scalar -> SMEM

    block_rows = _choose_block_rows(rows)
    grid = (pl.cdiv(rows, block_rows),)

    out = pl.pallas_call(
        _logreg_kernel,
        out_shape=jax.ShapeDtypeStruct((rows, _SAMPLES_PER_ROW), jnp.float32),
        grid=grid,
        in_specs=[
            # bias: 1 scalar, resident in SMEM for the whole kernel.
            pl.BlockSpec(memory_space=pltpu.MemorySpace.SMEM),
            # x: native interleaved layout, double-buffered per grid step.
            pl.BlockSpec((block_rows, _ROW_LANES), lambda i: (i, 0)),
            # G: 128 KiB, constant block index -> stays resident in VMEM.
            pl.BlockSpec((_ROW_LANES, _SAMPLES_PER_ROW), lambda i: (0, 0)),
        ],
        out_specs=pl.BlockSpec((block_rows, _SAMPLES_PER_ROW),
                               lambda i: (i, 0)),
        compiler_params=pltpu.CompilerParams(
            dimension_semantics=("parallel",),   # v7x: shard steps over 2 TCs
            vmem_limit_bytes=32 * 1024 * 1024,   # safe on v5e/v6e/v7x
        ),
    )(b, x2d, g)

    y = out.reshape(-1)          # free: flat order == sample order
    if n_pad != n:
        y = y[:n]                # slice only when padding was added
    return y.reshape(n, 1)


def logistic_reg_forward(x, weight, bias, *, force_kernel=False):
    """Forward pass of LogisticReg: sigmoid(x @ weight.T + bias).

    x: (N, 2); weight: (1, 2) [PyTorch nn.Linear layout]; bias: (1,).
    Returns (N, 1) float32.
    """
    n = x.shape[0]
    if n < _MIN_PALLAS_BATCH and not force_kernel:
        # Sub-vreg workloads: launch/step overhead dominates; XLA fuses this.
        return jax.nn.sigmoid(
            x.astype(jnp.float32) @ weight.astype(jnp.float32).T
            + bias.astype(jnp.float32))
    return _logreg_pallas(x, weight, bias)


if __name__ == "__main__":
    key = jax.random.PRNGKey(0)
    kx, kw, kb = jax.random.split(key, 3)

    # Shapes consistent with the module: create_datas() -> 200 samples x 2
    # features (two Gaussian blobs around +/-1.7, shifted by +1.0).
    N = 200
    base = jax.random.normal(kx, (N, 2), dtype=jnp.float32)
    signs = jnp.where((jnp.arange(N) < N // 2)[:, None], 1.7, -1.7)
    x = base + signs + 1.0

    # nn.Linear(2, 1) parameters: weight (1, 2), bias (1,).
    weight = jax.random.normal(kw, (1, 2), dtype=jnp.float32) * 0.1
    bias = jax.random.normal(kb, (1,), dtype=jnp.float32) * 0.1

    def ref(xx):
        return jax.nn.sigmoid(xx @ weight.T + bias)

    # Force the Pallas path so the kernel itself is exercised at this small N.
    y = jax.block_until_ready(
        logistic_reg_forward(x, weight, bias, force_kernel=True))
    assert y.shape == (N, 1)
    assert jnp.allclose(y, ref(x), atol=2e-3, rtol=2e-3), (
        float(jnp.max(jnp.abs(y - ref(x)))))

    # Second shape: exercises padding (1300 -> 2048) and a 2-step grid.
    N2 = 1300
    x2 = jax.random.normal(jax.random.PRNGKey(1), (N2, 2), dtype=jnp.float32)
    y2 = jax.block_until_ready(logistic_reg_forward(x2, weight, bias))
    assert y2.shape == (N2, 1)
    assert jnp.allclose(y2, ref(x2), atol=2e-3, rtol=2e-3), (
        float(jnp.max(jnp.abs(y2 - ref(x2)))))

    # Sanity-check the small-batch (non-Pallas) gated path too.
    y_gated = jax.block_until_ready(logistic_reg_forward(x, weight, bias))
    assert jnp.allclose(y_gated, ref(x), atol=1e-5, rtol=1e-5)

    print("KERNEL_OK")
</pallas_src>

<mosaic_0001>
module attributes {stable_mosaic.version = 11 : i64} {
  func.func @_logreg_kernel(%arg0: i32, %arg1: memref<1xf32, #tpu.memory_space<smem>>, %arg2: memref<8x256xf32, #tpu.memory_space<vmem>>, %arg3: memref<256x128xf32, #tpu.memory_space<vmem>>, %arg4: memref<8x128xf32, #tpu.memory_space<vmem>>) attributes {dimension_semantics = [#tpu.dimension_semantics<parallel>], iteration_bounds = array<i64: 1>, scalar_prefetch = 0 : i64, scratch_operands = 0 : i64, tpu.core_type = #tpu.core_type<tc>, window_params = [{transform_indices = @transform_0, window_bounds = array<i64: 1>}, {transform_indices = @transform_1, window_bounds = array<i64: 8, 256>}, {pipeline_mode = #tpu.pipeline_mode<synchronous>, transform_indices = @transform_2, window_bounds = array<i64: 256, 128>}, {transform_indices = @transform_3, window_bounds = array<i64: 8, 128>}]} {
    %c0 = arith.constant 0 : index
    %c0_0 = arith.constant 0 : index
    %0 = vector.load %arg2[%c0, %c0_0] : memref<8x256xf32, #tpu.memory_space<vmem>>, vector<8x256xf32>
    %c0_1 = arith.constant 0 : index
    %c0_2 = arith.constant 0 : index
    %1 = vector.load %arg3[%c0_1, %c0_2] : memref<256x128xf32, #tpu.memory_space<vmem>>, vector<256x128xf32>
    %cst = arith.constant dense<0.000000e+00> : vector<8x128xf32>
    %2 = tpu.matmul %0, %1, %cst {dimension_numbers = #tpu.dot_dimension_numbers<[1], [0], [0], [1], [0, 0, 1, 1], [], []>} : vector<8x256xf32>, vector<256x128xf32>, vector<8x128xf32> -> vector<8x128xf32>
    %c0_3 = arith.constant 0 : index
    %3 = memref.load %arg1[%c0_3] : memref<1xf32, #tpu.memory_space<smem>>
    %4 = vector.broadcast %3 : f32 to vector<8x128xf32>
    %5 = arith.addf %2, %4 : vector<8x128xf32>
    %cst_4 = arith.constant 5.000000e-01 : f32
    %6 = vector.broadcast %cst_4 : f32 to vector<8x128xf32>
    %7 = arith.mulf %6, %5 : vector<8x128xf32>
    %8 = math.tanh %7 : vector<8x128xf32>
    %cst_5 = arith.constant 5.000000e-01 : f32
    %9 = vector.broadcast %cst_5 : f32 to vector<8x128xf32>
    %10 = arith.mulf %9, %8 : vector<8x128xf32>
    %cst_6 = arith.constant 5.000000e-01 : f32
    %11 = vector.broadcast %cst_6 : f32 to vector<8x128xf32>
    %12 = arith.addf %10, %11 : vector<8x128xf32>
    %c0_7 = arith.constant 0 : index
    %c0_8 = arith.constant 0 : index
    %13 = vector.load %arg4[%c0_7, %c0_8] : memref<8x128xf32, #tpu.memory_space<vmem>>, vector<8x128xf32>
    tpu.vector_store %arg4[%c0_7, %c0_8], %12 {strides = array<i32>} : memref<8x128xf32, #tpu.memory_space<vmem>>, vector<8x128xf32>,
    return
  }
  func.func @transform_0(%arg0: i32) -> i32 {
    %c0_i32 = arith.constant 0 : i32
    %c0_i32_0 = arith.constant 0 : i32
    return %c0_i32 : i32
  }
  func.func @transform_1(%arg0: i32) -> (i32, i32) {
    %c0_i32 = arith.constant 0 : i32
    %c0_i32_0 = arith.constant 0 : i32
    return %arg0, %c0_i32 : i32, i32
  }
  func.func @transform_2(%arg0: i32) -> (i32, i32) {
    %c0_i32 = arith.constant 0 : i32
    %c0_i32_0 = arith.constant 0 : i32
    %c0_i32_1 = arith.constant 0 : i32
    return %c0_i32, %c0_i32_0 : i32, i32
  }
  func.func @transform_3(%arg0: i32) -> (i32, i32) {
    %c0_i32 = arith.constant 0 : i32
    %c0_i32_0 = arith.constant 0 : i32
    return %arg0, %c0_i32 : i32, i32
  }
}

</mosaic_0001>

<llo_original>
// kernel: tpu_custom_call.1
$region0: #{tpu_custom_call.1}
  #allocation0 [shape = 'u32[]', space=smem, size = 0x4, offset = 0x4, fixed_abs, tag = 'smem constant byte address 0x4 - core index']
  #allocation1 [shape = 'u32[144,128]{1,0:T(1,128)}', space=vmem, size = 0x12000, scoped, tag = 'internal scratch']
  #allocation2 [shape = 'f32[1]{0:T(128)S(6)}', space=smem, size = 0x200, scoped, tag = 'scoped memory for tpu_custom_call.1']
  %s0 = inlined_call_operand.<no memory space> [shape: f32[1], index: 0, kind: input, shape index: {}]
  %s1 = inlined_call_operand.hbm [shape: f32[8,256], index: 1, kind: input, shape index: {}]
  %s2 = inlined_call_operand.hbm [shape: f32[256,128], index: 2, kind: input, shape index: {}]
  %s3 = inlined_call_operand.hbm [shape: f32[8,128], index: 3, kind: output, shape index: {}]
  %s4 = sld [smem:[#allocation0]]
  $region30: #{tpu_custom_call.1} parent=0
    _
  %s6 = ssub.s32 1, %s4
  %s7 = scalar_select 0, %s6, %s4
  %8 = sst [smem:[#allocation2]] %s0
  $region1: #{tpu_custom_call.1} parent=0
    #allocation3 [shape = 'u8[8192]{0}', space=vmem, size = 0x2000, scoped, tag = 'input window, operand 1, single buffered']
    #allocation4 [shape = 's32[1]{0}', space=sflag, size = 0x4, scoped, tag = 'scoped memory for tpu_custom_call.1']
    #allocation5 [shape = 's32[1]{0}', space=sflag, size = 0x4, scoped, tag = 'scoped memory for tpu_custom_call.1']
    #allocation6 [shape = 'u8[131072]{0}', space=vmem, size = 0x20000, scoped, tag = 'input window, operand 2, single buffered']
    #allocation7 [shape = 's32[1]{0}', space=sflag, size = 0x4, scoped, tag = 'scoped memory for tpu_custom_call.1']
    #allocation8 [shape = 'u8[4096]{0}', space=vmem, size = 0x1000, scoped, tag = 'output window, operand 0, single buffered']
    %9 = vsyncpa [#allocation4], 0
    %10 = vsyncpa [#allocation7], 0
    %11 = vsyncpa [#allocation5], 0
    // Predicated region
    $region2: #{tpu_custom_call.1} parent=1 // pred_check
      _
    $region3: #{tpu_custom_call.1} parent=1 // pred_check_branch
      %13 = sbr.rel (0) target = $region5
    $region4: #{tpu_custom_call.1} parent=1 // pred_region
      _
    $region5: #{tpu_custom_call.1} parent=1 // pred_fallthru
      _
    // Predicated region
    $region6: #{tpu_custom_call.1} parent=1 // pred_check
      _
    $region7: #{tpu_custom_call.1} parent=1 // pred_check_branch
      %15 = sbr.rel (0) target = $region9
    $region8: #{tpu_custom_call.1} parent=1 // pred_region
      %s17 = ssub.s32 256, 256
      %18 = vsyncadd [#allocation4], %s17
      %s20 = sshll.u32 [#allocation3], 4
      %s21 = int_to_ptr.vmem [resolvable:$true] %s20
      %23 = dma.hbm_to_vmem [thread:$0]  %s1, 256, %s21, [#allocation4]
    $region9: #{tpu_custom_call.1} parent=1 // pred_fallthru
      _
    // Predicated region
    $region10: #{tpu_custom_call.1} parent=1 // pred_check
      _
    $region11: #{tpu_custom_call.1} parent=1 // pred_check_branch
      %25 = sbr.rel (0) target = $region13
    $region12: #{tpu_custom_call.1} parent=1 // pred_region
      %s27 = ssub.s32 4096, 4096
      %28 = vsyncadd [#allocation7], %s27
      %s29 = sshll.u32 [#allocation6], 4
      %s30 = int_to_ptr.vmem [resolvable:$true] %s29
      %35 = dma.hbm_to_vmem [thread:$0]  %s2, 4096, %s30, [#allocation7], 128, 128, 8
    $region13: #{tpu_custom_call.1} parent=1 // pred_fallthru
      _
    // Predicated region
    $region14: #{tpu_custom_call.1} parent=1 // pred_check
      _
    $region15: #{tpu_custom_call.1} parent=1 // pred_check_branch
      %37 = sbr.rel (0) target = $region17
    $region16: #{tpu_custom_call.1} parent=1 // pred_region
      %38 = dma.done [#allocation4], 256
    $region17: #{tpu_custom_call.1} parent=1 // pred_fallthru
      _
    // Predicated region
    $region18: #{tpu_custom_call.1} parent=1 // pred_check
      _
    $region19: #{tpu_custom_call.1} parent=1 // pred_check_branch
      %40 = sbr.rel (0) target = $region21
    $region20: #{tpu_custom_call.1} parent=1 // pred_region
      %41 = dma.done [#allocation7], 4096
    $region21: #{tpu_custom_call.1} parent=1 // pred_fallthru
      _
    %v42 = vld [vmem:[#allocation3] sm:$0xff]
    %v43 = vld [vmem:[#allocation3 + $0x8] sm:$0xff]
    %v44 = vld [vmem:[#allocation6] sm:$0xff]
    %v45 = vld [vmem:[#allocation6 + $0x8] sm:$0xff]
    %v46 = vld [vmem:[#allocation6 + $0x10] sm:$0xff]
    %v47 = vld [vmem:[#allocation6 + $0x18] sm:$0xff]
    %v48 = vld [vmem:[#allocation6 + $0x20] sm:$0xff]
    %v49 = vld [vmem:[#allocation6 + $0x28] sm:$0xff]
    %v50 = vld [vmem:[#allocation6 + $0x30] sm:$0xff]
    %v51 = vld [vmem:[#allocation6 + $0x38] sm:$0xff]
    %v52 = vld [vmem:[#allocation6 + $0x40] sm:$0xff]
    %v53 = vld [vmem:[#allocation6 + $0x48] sm:$0xff]
    %v54 = vld [vmem:[#allocation6 + $0x50] sm:$0xff]
    %v55 = vld [vmem:[#allocation6 + $0x58] sm:$0xff]
    %v56 = vld [vmem:[#allocation6 + $0x60] sm:$0xff]
    %v57 = vld [vmem:[#allocation6 + $0x68] sm:$0xff]
    %v58 = vld [vmem:[#allocation6 + $0x70] sm:$0xff]
    %v59 = vld [vmem:[#allocation6 + $0x78] sm:$0xff]
    %v60 = vld [vmem:[#allocation6 + $0x80] sm:$0xff]
    %v61 = vld [vmem:[#allocation6 + $0x88] sm:$0xff]
    %v62 = vld [vmem:[#allocation6 + $0x90] sm:$0xff]
    %v63 = vld [vmem:[#allocation6 + $0x98] sm:$0xff]
    %v64 = vld [vmem:[#allocation6 + $0xa0] sm:$0xff]
    %v65 = vld [vmem:[#allocation6 + $0xa8] sm:$0xff]
    %v66 = vld [vmem:[#allocation6 + $0xb0] sm:$0xff]
    %v67 = vld [vmem:[#allocation6 + $0xb8] sm:$0xff]
    %v68 = vld [vmem:[#allocation6 + $0xc0] sm:$0xff]
    %v69 = vld [vmem:[#allocation6 + $0xc8] sm:$0xff]
    %v70 = vld [vmem:[#allocation6 + $0xd0] sm:$0xff]
    %v71 = vld [vmem:[#allocation6 + $0xd8] sm:$0xff]
    %v72 = vld [vmem:[#allocation6 + $0xe0] sm:$0xff]
    %v73 = vld [vmem:[#allocation6 + $0xe8] sm:$0xff]
    %v74 = vld [vmem:[#allocation6 + $0xf0] sm:$0xff]
    %v75 = vld [vmem:[#allocation6 + $0xf8] sm:$0xff]
    %s76 = sld [smem:[#allocation2]]
    %v77 = vstv %s76
    %78 = vmatprep.subr.mxu0 0.0
    %79 = vmatpush1.msra.mxu0 %v44
    %80 = vmatprep.subr.mxu0 0.0
    %81 = vmatpush1.msra.mxu0 %v45
    %82 = vmatprep.subr.mxu0 0.0
    %83 = vmatpush1.msra.mxu0 %v46
    %84 = vmatprep.subr.mxu0 0.0
    %85 = vmatpush1.msra.mxu0 %v47
    %86 = vmatprep.subr.mxu0 0.0
    %87 = vmatpush1.msra.mxu0 %v48
    %88 = vmatprep.subr.mxu0 0.0
    %89 = vmatpush1.msra.mxu0 %v49
    %90 = vmatprep.subr.mxu0 0.0
    %91 = vmatpush1.msra.mxu0 %v50
    %92 = vmatprep.subr.mxu0 0.0
    %93 = vmatpush1.msra.mxu0 %v51
    %94 = vmatprep.subr.mxu0 0.0
    %95 = vmatpush1.msra.mxu0 %v52
    %96 = vmatprep.subr.mxu0 0.0
    %97 = vmatpush1.msra.mxu0 %v53
    %98 = vmatprep.subr.mxu0 0.0
    %99 = vmatpush1.msra.mxu0 %v54
    %100 = vmatprep.subr.mxu0 0.0
    %101 = vmatpush1.msra.mxu0 %v55
    %102 = vmatprep.subr.mxu0 0.0
    %103 = vmatpush1.msra.mxu0 %v56
    %104 = vmatprep.subr.mxu0 0.0
    %105 = vmatpush1.msra.mxu0 %v57
    %106 = vmatprep.subr.mxu0 0.0
    %107 = vmatpush1.msra.mxu0 %v58
    %108 = vmatprep.subr.mxu0 0.0
    %109 = vmatpush1.msra.mxu0 %v59
    %110 = vmatprep.subr.mxu0 0.0
    %111 = vmatpush1.msra.mxu0 %v60
    %112 = vmatprep.subr.mxu0 0.0
    %113 = vmatpush1.msra.mxu0 %v61
    %114 = vmatprep.subr.mxu0 0.0
    %115 = vmatpush1.msra.mxu0 %v62
    %116 = vmatprep.subr.mxu0 0.0
    %117 = vmatpush1.msra.mxu0 %v63
    %118 = vmatprep.subr.mxu0 0.0
    %119 = vmatpush1.msra.mxu0 %v64
    %120 = vmatprep.subr.mxu0 0.0
    %121 = vmatpush1.msra.mxu0 %v65
    %122 = vmatprep.subr.mxu0 0.0
    %123 = vmatpush1.msra.mxu0 %v66
    %124 = vmatprep.subr.mxu0 0.0
    %125 = vmatpush1.msra.mxu0 %v67
    %126 = vmatprep.subr.mxu0 0.0
    %127 = vmatpush1.msra.mxu0 %v68
    %128 = vmatprep.subr.mxu0 0.0
    %129 = vmatpush1.msra.mxu0 %v69
    %130 = vmatprep.subr.mxu0 0.0
    %131 = vmatpush1.msra.mxu0 %v70
    %132 = vmatprep.subr.mxu0 0.0
    %133 = vmatpush1.msra.mxu0 %v71
    %134 = vmatprep.subr.mxu0 0.0
    %135 = vmatpush1.msra.mxu0 %v72
    %136 = vmatprep.subr.mxu0 0.0
    %137 = vmatpush1.msra.mxu0 %v73
    %138 = vmatprep.subr.mxu0 0.0
    %139 = vmatpush1.msra.mxu0 %v74
    %140 = vmatprep.subr.mxu0 0.0
    %141 = vmatpush1.msra.mxu0 %v75
    %142 = vmatprep.mubr.f32.mxu0 %v43
    %143 = vmatmul.mubr.f32.gmra.mrb[0].mxu0 %v42
    %v144 = vpop.f32.mrb[0].mxu0
    %v145 = vadd.f32 %v77, %v144
    %v146 = vpop.f32.mrb[0].mxu0
    %147 = vdwg.mxu0
    %v148 = vmul.f32 %v145, 0.5
    %v149 = vtanh.pop %v148
    %v150 = vmul.f32 %v149, 0.5
    %v151 = vadd.f32 %v150, 0.5
    %152 = vst [vmem:[#allocation8] sm:$0xff] %v151
    // Predicated region
    $region22: #{tpu_custom_call.1} parent=1 // pred_check
      _
    $region23: #{tpu_custom_call.1} parent=1 // pred_check_branch
      %154 = sbr.rel (0) target = $region25
    $region24: #{tpu_custom_call.1} parent=1 // pred_region
      %s156 = ssub.s32 128, 128
      %157 = vsyncadd [#allocation5], %s156
      %s159 = sshll.u32 [#allocation8], 4
      %s160 = int_to_ptr.vmem [resolvable:$true] %s159
      %162 = dma.vmem_to_hbm [thread:$0]  %s160, 128, %s3, [#allocation5]
    $region25: #{tpu_custom_call.1} parent=1 // pred_fallthru
      _
    // Predicated region
    $region26: #{tpu_custom_call.1} parent=1 // pred_check
      _
    $region27: #{tpu_custom_call.1} parent=1 // pred_check_branch
      %164 = sbr.rel (0) target = $region29
    $region28: #{tpu_custom_call.1} parent=1 // pred_region
      %165 = dma.done [#allocation5], 128
    $region29: #{tpu_custom_call.1} parent=1 // pred_fallthru
      _
    %166 = vsyncpa [#allocation4], 1
    %167 = vsyncpa [#allocation7], 1
    %168 = vsyncpa [#allocation5], 1

</llo_original>
